<compile_context>
chip_gen: v5e
topology: v5e:2x2
jax: 0.10.0
libtpu: 0.0.40
codegen_flags: <defaults>
</compile_context>

<pallas_src>
import jax
import jax.numpy as jnp
from jax.experimental import pallas as pl
from jax.experimental.pallas import tpu as pltpu


def _round_up(x, m):
    return ((x + m - 1) // m) * m


def _largest_divisor_le(n, cap):
    cap = max(1, min(n, cap))
    for d in range(cap, 0, -1):
        if n % d == 0:
            return d
    return 1


# ----------------------------- kernels --------------------------------------


def _mxu_kernel(x_ref, w_ref, s_ref, b_ref, o_ref):
    # x_ref: (bn, Cin, T)  lane-dense spatial tiles, bn images per grid step
    # w_ref: (Cb, Cin)     1x1 conv weight block (input dtype)
    # s_ref: (Cb, 1) f32   BN scale = gamma * rsqrt(var + eps)
    # b_ref: (Cb, 1) f32   fused bias = (conv_bias - mean) * scale + beta
    # o_ref: (bn, Cb, T)
    w = w_ref[...]
    scale = s_ref[...]
    bias = b_ref[...]
    bn = x_ref.shape[0]
    for b in range(bn):                                   # static unroll
        acc = jnp.dot(w, x_ref[b], preferred_element_type=jnp.float32)
        y = acc * scale + bias                            # f32 epilogue
        o_ref[b] = jnp.maximum(y, 0.0).astype(o_ref.dtype)


def _vpu_kernel(x_ref, w_ref, s_ref, b_ref, o_ref):
    # Tiny-channel path (Cin <= 8): unrolled outer-product multiply-adds on the
    # VPU (MXU would run at <1% utilization).  All math in f32.
    w = w_ref[...].astype(jnp.float32) * s_ref[...]       # fold scale in f32
    bias = b_ref[...]
    bn, cin = x_ref.shape[0], x_ref.shape[1]
    for b in range(bn):
        x = x_ref[b].astype(jnp.float32)                  # (Cin, T)
        acc = w[:, 0:1] * x[0:1, :]
        for c in range(1, cin):
            acc = acc + w[:, c:c + 1] * x[c:c + 1, :]
        y = acc + bias
        o_ref[b] = jnp.maximum(y, 0.0).astype(o_ref.dtype)


# ----------------------------- wrapper ---------------------------------------

_SINGLE_BUFFER_CONSTS_OK = None   # probe pl.Buffered(1) support once, then cache


def conv1x1_bn_relu(x_nchw, weight, conv_bias, gamma, beta, run_mean, run_var,
                    eps=1e-5, spatial_tile=2048):
    """Fused 1x1 Conv + eval-mode BatchNorm + ReLU on an NCHW input.

    x_nchw: (N, Cin, H, W); weight: (Cout, Cin) or (Cout, Cin, 1, 1).
    conv_bias may be None (Conv2d(bias=False)). Returns (N, Cout, H, W).
    """
    global _SINGLE_BUFFER_CONSTS_OK

    N, Cin, H, W = x_nchw.shape
    weight = weight.reshape(weight.shape[0], Cin)
    Cout = weight.shape[0]
    P = H * W
    out_dtype = x_nchw.dtype
    x_bytes = jnp.dtype(x_nchw.dtype).itemsize
    o_bytes = jnp.dtype(out_dtype).itemsize

    # ---- per-generation VMEM budget (64 MiB on v7x, 128 MiB on v5e/v6e) -----
    try:
        vmem_cap = int(pltpu.get_tpu_info().vmem_capacity_bytes)
    except Exception:
        vmem_cap = 64 * 1024 * 1024                       # conservative default
    vmem_budget = (vmem_cap * 11) // 20                   # ~55% for our tiles
    vmem_limit = int(min(vmem_cap - 4 * 1024 * 1024, (vmem_cap * 3) // 4))

    # ---- Cout blocking caps the f32 accumulator / output tile --------------
    cout_blk = Cout if Cout <= 512 else 256
    n_cout = pl.cdiv(Cout, cout_blk)

    # ---- spatial tile: largest lane-dense (x128) tile that fits the budget --
    P128 = _round_up(P, 128)
    # resident constants: weight (counted x2 in case the Buffered(1) fallback
    # is taken) + lane-padded scale/bias blocks (x2 buffers each)
    fixed = 2 * cout_blk * Cin * x_bytes + 2 * 2 * cout_blk * 128 * 4
    # per spatial column (per image in the block): 2x-buffered x + out + f32 acc
    per_col = 2 * Cin * x_bytes + 2 * cout_blk * o_bytes + cout_blk * 4
    t_cap = max(128, ((vmem_budget - fixed) // per_col) // 128 * 128)
    t = min(t_cap, _round_up(min(spatial_tile, P128), 128), P128)
    n_sp = pl.cdiv(P128, t)
    t = min(t, _round_up(pl.cdiv(P128, n_sp), 128))       # balance tile sizes
    n_sp = pl.cdiv(P, t)

    # ---- batch blocking for small feature maps (amortize per-step overhead) -
    bn = 1
    if n_sp == 1 and N > 1:
        want = max(1, min(spatial_tile, 2048) // t)
        fit = max(1, int((vmem_budget - fixed) // (per_col * t)))
        bn = _largest_divisor_le(N, min(want, fit))
    n_b = N // bn

    # ---- guarantee >=2 grid steps so both v7x TensorCores get work ----------
    if n_b * n_cout * n_sp == 1:
        if bn > 1:
            bn = _largest_divisor_le(N, bn // 2)
            n_b = N // bn
        elif P128 >= 256:
            t = _round_up(pl.cdiv(P128, 2), 128)
            n_sp = pl.cdiv(P, t)

    # ---- flatten spatial dims (free reshape; NO pad, NO output slice) -------
    x_flat = x_nchw.reshape(N, Cin, P)

    # ---- eval-mode BN as an f32 per-channel scale + fused bias --------------
    if conv_bias is None:
        conv_bias = jnp.zeros((Cout,), jnp.float32)
    inv_std = jax.lax.rsqrt(run_var.astype(jnp.float32) + jnp.float32(eps))
    scale = (gamma.astype(jnp.float32) * inv_std).reshape(Cout, 1)
    fbias = ((conv_bias.astype(jnp.float32) - run_mean.astype(jnp.float32))
             * scale[:, 0] + beta.astype(jnp.float32)).reshape(Cout, 1)
    w_x = weight.astype(x_flat.dtype)                     # weight stays in x dtype

    kernel = _mxu_kernel if Cin > 8 else _vpu_kernel
    grid = (n_b, n_cout, n_sp)

    cost = pl.CostEstimate(
        flops=2 * N * P * Cin * Cout,
        transcendentals=0,
        bytes_accessed=(N * P * (Cin * x_bytes + Cout * o_bytes)
                        + Cout * Cin * x_bytes + 2 * Cout * 4),
    )

    def _call(single_buffer_consts):
        const_kw = ({"pipeline_mode": pl.Buffered(1)}
                    if single_buffer_consts else {})
        return pl.pallas_call(
            kernel,
            out_shape=jax.ShapeDtypeStruct((N, Cout, P), out_dtype),
            grid_spec=pltpu.PrefetchScalarGridSpec(
                num_scalar_prefetch=0,
                grid=grid,
                in_specs=[
                    pl.BlockSpec((bn, Cin, t), lambda nb, co, p: (nb, 0, p)),
                    pl.BlockSpec((cout_blk, Cin),
                                 lambda nb, co, p: (co, 0), **const_kw),
                    pl.BlockSpec((cout_blk, 1),
                                 lambda nb, co, p: (co, 0), **const_kw),
                    pl.BlockSpec((cout_blk, 1),
                                 lambda nb, co, p: (co, 0), **const_kw),
                ],
                out_specs=pl.BlockSpec((bn, cout_blk, t),
                                       lambda nb, co, p: (nb, co, p)),
            ),
            compiler_params=pltpu.CompilerParams(
                dimension_semantics=("parallel", "parallel", "parallel"),
                vmem_limit_bytes=vmem_limit,
            ),
            cost_estimate=cost,
        )

    if _SINGLE_BUFFER_CONSTS_OK is None:
        try:
            out_flat = _call(True)(x_flat, w_x, scale, fbias)
            out_flat = jax.block_until_ready(out_flat)    # surface lowering errors
            _SINGLE_BUFFER_CONSTS_OK = True
        except Exception:
            _SINGLE_BUFFER_CONSTS_OK = False
            out_flat = _call(False)(x_flat, w_x, scale, fbias)
    elif _SINGLE_BUFFER_CONSTS_OK:
        out_flat = _call(True)(x_flat, w_x, scale, fbias)
    else:
        out_flat = _call(False)(x_flat, w_x, scale, fbias)

    return out_flat.reshape(N, Cout, H, W)


def reference(x_nchw, weight, conv_bias, gamma, beta, run_mean, run_var,
              eps=1e-5):
    # Pure-JAX reference of the same math (eval-mode BN).
    y = (jnp.einsum('nchw,oc->nohw', x_nchw, weight)
         + conv_bias[None, :, None, None])
    inv_std = 1.0 / jnp.sqrt(run_var + eps)
    y = ((y - run_mean[None, :, None, None])
         * (gamma * inv_std)[None, :, None, None]
         + beta[None, :, None, None])
    return jnp.maximum(y, 0.0)


if __name__ == "__main__":
    key = jax.random.PRNGKey(0)
    k_x, k_w, k_b = jax.random.split(key, 3)

    N, Cin, H, W = 2, 4, 16, 16
    Cout = 8

    x = jax.random.normal(k_x, (N, Cin, H, W), dtype=jnp.float32)
    # Conv2d(in, out, 1) params: weight (Cout, Cin, 1, 1)->(Cout, Cin), bias (Cout,)
    weight = jax.random.normal(k_w, (Cout, Cin), dtype=jnp.float32) * 0.1
    conv_bias = jax.random.normal(k_b, (Cout,), dtype=jnp.float32) * 0.1
    # BatchNorm2d default params / running stats (eval mode).
    gamma = jnp.ones((Cout,), jnp.float32)
    beta = jnp.zeros((Cout,), jnp.float32)
    run_mean = jnp.zeros((Cout,), jnp.float32)
    run_var = jnp.ones((Cout,), jnp.float32)

    out = conv1x1_bn_relu(x, weight, conv_bias, gamma, beta, run_mean, run_var)
    out = jax.block_until_ready(out)

    ref = reference(x, weight, conv_bias, gamma, beta, run_mean, run_var)
    assert out.shape == (N, Cout, H, W), out.shape
    err = float(jnp.max(jnp.abs(out - ref)))
    assert err < 1e-5, err

    print("KERNEL_OK")
</pallas_src>

<mosaic_0001>
module attributes {stable_mosaic.version = 11 : i64} {
  func.func @_vpu_kernel(%arg0: i32, %arg1: i32, %arg2: i32, %arg3: memref<1x4x256xf32, #tpu.memory_space<vmem>>, %arg4: memref<8x4xf32, #tpu.memory_space<vmem>>, %arg5: memref<8x1xf32, #tpu.memory_space<vmem>>, %arg6: memref<8x1xf32, #tpu.memory_space<vmem>>, %arg7: memref<1x8x256xf32, #tpu.memory_space<vmem>>) attributes {dimension_semantics = [#tpu.dimension_semantics<parallel>, #tpu.dimension_semantics<parallel>, #tpu.dimension_semantics<parallel>], iteration_bounds = array<i64: 2, 1, 1>, scalar_prefetch = 0 : i64, scratch_operands = 0 : i64, tpu.core_type = #tpu.core_type<tc>, window_params = [{transform_indices = @transform_0, window_bounds = array<i64: 1, 4, 256>}, {pipeline_mode = #tpu.pipeline_mode<synchronous>, transform_indices = @transform_1, window_bounds = array<i64: 8, 4>}, {pipeline_mode = #tpu.pipeline_mode<synchronous>, transform_indices = @transform_2, window_bounds = array<i64: 8, 1>}, {pipeline_mode = #tpu.pipeline_mode<synchronous>, transform_indices = @transform_3, window_bounds = array<i64: 8, 1>}, {transform_indices = @transform_4, window_bounds = array<i64: 1, 8, 256>}]} {
    %c0 = arith.constant 0 : index
    %c0_0 = arith.constant 0 : index
    %0 = vector.load %arg4[%c0, %c0_0] : memref<8x4xf32, #tpu.memory_space<vmem>>, vector<8x4xf32>
    %c0_1 = arith.constant 0 : index
    %c0_2 = arith.constant 0 : index
    %1 = vector.load %arg5[%c0_1, %c0_2] : memref<8x1xf32, #tpu.memory_space<vmem>>, vector<8x1xf32>
    %2 = vector.broadcast %1 : vector<8x1xf32> to vector<8x4xf32>
    %3 = arith.mulf %0, %2 : vector<8x4xf32>
    %c0_3 = arith.constant 0 : index
    %c0_4 = arith.constant 0 : index
    %4 = vector.load %arg6[%c0_3, %c0_4] : memref<8x1xf32, #tpu.memory_space<vmem>>, vector<8x1xf32>
    %c0_5 = arith.constant 0 : index
    %c0_6 = arith.constant 0 : index
    %c0_7 = arith.constant 0 : index
    %5 = vector.load %arg3[%c0_5, %c0_6, %c0_7] : memref<1x4x256xf32, #tpu.memory_space<vmem>>, vector<1x4x256xf32>
    %6 = vector.shape_cast %5 : vector<1x4x256xf32> to vector<4x256xf32>
    %7 = vector.extract_strided_slice %3 {offsets = [0, 0], sizes = [8, 1], strides = [1, 1]} : vector<8x4xf32> to vector<8x1xf32>
    %8 = vector.extract_strided_slice %6 {offsets = [0, 0], sizes = [1, 256], strides = [1, 1]} : vector<4x256xf32> to vector<1x256xf32>
    %9 = vector.broadcast %7 : vector<8x1xf32> to vector<8x256xf32>
    %10 = vector.broadcast %8 : vector<1x256xf32> to vector<8x256xf32>
    %11 = arith.mulf %9, %10 : vector<8x256xf32>
    %12 = vector.extract_strided_slice %3 {offsets = [0, 1], sizes = [8, 1], strides = [1, 1]} : vector<8x4xf32> to vector<8x1xf32>
    %13 = vector.extract_strided_slice %6 {offsets = [1, 0], sizes = [1, 256], strides = [1, 1]} : vector<4x256xf32> to vector<1x256xf32>
    %14 = vector.broadcast %12 : vector<8x1xf32> to vector<8x256xf32>
    %15 = vector.broadcast %13 : vector<1x256xf32> to vector<8x256xf32>
    %16 = arith.mulf %14, %15 : vector<8x256xf32>
    %17 = arith.addf %11, %16 : vector<8x256xf32>
    %18 = vector.extract_strided_slice %3 {offsets = [0, 2], sizes = [8, 1], strides = [1, 1]} : vector<8x4xf32> to vector<8x1xf32>
    %19 = vector.extract_strided_slice %6 {offsets = [2, 0], sizes = [1, 256], strides = [1, 1]} : vector<4x256xf32> to vector<1x256xf32>
    %20 = vector.broadcast %18 : vector<8x1xf32> to vector<8x256xf32>
    %21 = vector.broadcast %19 : vector<1x256xf32> to vector<8x256xf32>
    %22 = arith.mulf %20, %21 : vector<8x256xf32>
    %23 = arith.addf %17, %22 : vector<8x256xf32>
    %24 = vector.extract_strided_slice %3 {offsets = [0, 3], sizes = [8, 1], strides = [1, 1]} : vector<8x4xf32> to vector<8x1xf32>
    %25 = vector.extract_strided_slice %6 {offsets = [3, 0], sizes = [1, 256], strides = [1, 1]} : vector<4x256xf32> to vector<1x256xf32>
    %26 = vector.broadcast %24 : vector<8x1xf32> to vector<8x256xf32>
    %27 = vector.broadcast %25 : vector<1x256xf32> to vector<8x256xf32>
    %28 = arith.mulf %26, %27 : vector<8x256xf32>
    %29 = arith.addf %23, %28 : vector<8x256xf32>
    %30 = vector.broadcast %4 : vector<8x1xf32> to vector<8x256xf32>
    %31 = arith.addf %29, %30 : vector<8x256xf32>
    %cst = arith.constant 0.000000e+00 : f32
    %32 = vector.broadcast %cst : f32 to vector<8x256xf32>
    %33 = arith.maximumf %31, %32 : vector<8x256xf32>
    %c0_8 = arith.constant 0 : index
    %c0_9 = arith.constant 0 : index
    %c0_10 = arith.constant 0 : index
    %34 = vector.load %arg7[%c0_8, %c0_9, %c0_10] : memref<1x8x256xf32, #tpu.memory_space<vmem>>, vector<1x8x256xf32>
    %35 = vector.shape_cast %34 : vector<1x8x256xf32> to vector<8x256xf32>
    %36 = vector.shape_cast %33 : vector<8x256xf32> to vector<1x8x256xf32>
    tpu.vector_store %arg7[%c0_8, %c0_9, %c0_10], %36 {strides = array<i32>} : memref<1x8x256xf32, #tpu.memory_space<vmem>>, vector<1x8x256xf32>,
    return
  }
  func.func @transform_0(%arg0: i32, %arg1: i32, %arg2: i32) -> (i32, i32, i32) {
    %c0_i32 = arith.constant 0 : i32
    %c0_i32_0 = arith.constant 0 : i32
    return %arg0, %c0_i32, %arg2 : i32, i32, i32
  }
  func.func @transform_1(%arg0: i32, %arg1: i32, %arg2: i32) -> (i32, i32) {
    %c0_i32 = arith.constant 0 : i32
    %c0_i32_0 = arith.constant 0 : i32
    return %arg1, %c0_i32 : i32, i32
  }
  func.func @transform_2(%arg0: i32, %arg1: i32, %arg2: i32) -> (i32, i32) {
    %c0_i32 = arith.constant 0 : i32
    %c0_i32_0 = arith.constant 0 : i32
    return %arg1, %c0_i32 : i32, i32
  }
  func.func @transform_3(%arg0: i32, %arg1: i32, %arg2: i32) -> (i32, i32) {
    %c0_i32 = arith.constant 0 : i32
    %c0_i32_0 = arith.constant 0 : i32
    return %arg1, %c0_i32 : i32, i32
  }
  func.func @transform_4(%arg0: i32, %arg1: i32, %arg2: i32) -> (i32, i32, i32) {
    %c0_i32 = arith.constant 0 : i32
    return %arg0, %arg1, %arg2 : i32, i32, i32
  }
}

module attributes {stable_mosaic.version = 11 : i64} {
  func.func @_vpu_kernel(%arg0: i32, %arg1: i32, %arg2: i32, %arg3: memref<1x4x256xf32, #tpu.memory_space<vmem>>, %arg4: memref<8x4xf32, #tpu.memory_space<vmem>>, %arg5: memref<8x1xf32, #tpu.memory_space<vmem>>, %arg6: memref<8x1xf32, #tpu.memory_space<vmem>>, %arg7: memref<1x8x256xf32, #tpu.memory_space<vmem>>) attributes {dimension_semantics = [#tpu.dimension_semantics<parallel>, #tpu.dimension_semantics<parallel>, #tpu.dimension_semantics<parallel>], iteration_bounds = array<i64: 2, 1, 1>, scalar_prefetch = 0 : i64, scratch_operands = 0 : i64, tpu.core_type = #tpu.core_type<tc>, window_params = [{transform_indices = @transform_0, window_bounds = array<i64: 1, 4, 256>}, {transform_indices = @transform_1, window_bounds = array<i64: 8, 4>}, {transform_indices = @transform_2, window_bounds = array<i64: 8, 1>}, {transform_indices = @transform_3, window_bounds = array<i64: 8, 1>}, {transform_indices = @transform_4, window_bounds = array<i64: 1, 8, 256>}]} {
    %c0 = arith.constant 0 : index
    %c0_0 = arith.constant 0 : index
    %0 = vector.load %arg4[%c0, %c0_0] : memref<8x4xf32, #tpu.memory_space<vmem>>, vector<8x4xf32>
    %c0_1 = arith.constant 0 : index
    %c0_2 = arith.constant 0 : index
    %1 = vector.load %arg5[%c0_1, %c0_2] : memref<8x1xf32, #tpu.memory_space<vmem>>, vector<8x1xf32>
    %2 = vector.broadcast %1 : vector<8x1xf32> to vector<8x4xf32>
    %3 = arith.mulf %0, %2 : vector<8x4xf32>
    %c0_3 = arith.constant 0 : index
    %c0_4 = arith.constant 0 : index
    %4 = vector.load %arg6[%c0_3, %c0_4] : memref<8x1xf32, #tpu.memory_space<vmem>>, vector<8x1xf32>
    %c0_5 = arith.constant 0 : index
    %c0_6 = arith.constant 0 : index
    %c0_7 = arith.constant 0 : index
    %5 = vector.load %arg3[%c0_5, %c0_6, %c0_7] : memref<1x4x256xf32, #tpu.memory_space<vmem>>, vector<1x4x256xf32>
    %6 = vector.shape_cast %5 : vector<1x4x256xf32> to vector<4x256xf32>
    %7 = vector.extract_strided_slice %3 {offsets = [0, 0], sizes = [8, 1], strides = [1, 1]} : vector<8x4xf32> to vector<8x1xf32>
    %8 = vector.extract_strided_slice %6 {offsets = [0, 0], sizes = [1, 256], strides = [1, 1]} : vector<4x256xf32> to vector<1x256xf32>
    %9 = vector.broadcast %7 : vector<8x1xf32> to vector<8x256xf32>
    %10 = vector.broadcast %8 : vector<1x256xf32> to vector<8x256xf32>
    %11 = arith.mulf %9, %10 : vector<8x256xf32>
    %12 = vector.extract_strided_slice %3 {offsets = [0, 1], sizes = [8, 1], strides = [1, 1]} : vector<8x4xf32> to vector<8x1xf32>
    %13 = vector.extract_strided_slice %6 {offsets = [1, 0], sizes = [1, 256], strides = [1, 1]} : vector<4x256xf32> to vector<1x256xf32>
    %14 = vector.broadcast %12 : vector<8x1xf32> to vector<8x256xf32>
    %15 = vector.broadcast %13 : vector<1x256xf32> to vector<8x256xf32>
    %16 = arith.mulf %14, %15 : vector<8x256xf32>
    %17 = arith.addf %11, %16 : vector<8x256xf32>
    %18 = vector.extract_strided_slice %3 {offsets = [0, 2], sizes = [8, 1], strides = [1, 1]} : vector<8x4xf32> to vector<8x1xf32>
    %19 = vector.extract_strided_slice %6 {offsets = [2, 0], sizes = [1, 256], strides = [1, 1]} : vector<4x256xf32> to vector<1x256xf32>
    %20 = vector.broadcast %18 : vector<8x1xf32> to vector<8x256xf32>
    %21 = vector.broadcast %19 : vector<1x256xf32> to vector<8x256xf32>
    %22 = arith.mulf %20, %21 : vector<8x256xf32>
    %23 = arith.addf %17, %22 : vector<8x256xf32>
    %24 = vector.extract_strided_slice %3 {offsets = [0, 3], sizes = [8, 1], strides = [1, 1]} : vector<8x4xf32> to vector<8x1xf32>
    %25 = vector.extract_strided_slice %6 {offsets = [3, 0], sizes = [1, 256], strides = [1, 1]} : vector<4x256xf32> to vector<1x256xf32>
    %26 = vector.broadcast %24 : vector<8x1xf32> to vector<8x256xf32>
    %27 = vector.broadcast %25 : vector<1x256xf32> to vector<8x256xf32>
    %28 = arith.mulf %26, %27 : vector<8x256xf32>
    %29 = arith.addf %23, %28 : vector<8x256xf32>
    %30 = vector.broadcast %4 : vector<8x1xf32> to vector<8x256xf32>
    %31 = arith.addf %29, %30 : vector<8x256xf32>
    %cst = arith.constant 0.000000e+00 : f32
    %32 = vector.broadcast %cst : f32 to vector<8x256xf32>
    %33 = arith.maximumf %31, %32 : vector<8x256xf32>
    %c0_8 = arith.constant 0 : index
    %c0_9 = arith.constant 0 : index
    %c0_10 = arith.constant 0 : index
    %34 = vector.load %arg7[%c0_8, %c0_9, %c0_10] : memref<1x8x256xf32, #tpu.memory_space<vmem>>, vector<1x8x256xf32>
    %35 = vector.shape_cast %34 : vector<1x8x256xf32> to vector<8x256xf32>
    %36 = vector.shape_cast %33 : vector<8x256xf32> to vector<1x8x256xf32>
    tpu.vector_store %arg7[%c0_8, %c0_9, %c0_10], %36 {strides = array<i32>} : memref<1x8x256xf32, #tpu.memory_space<vmem>>, vector<1x8x256xf32>,
    return
  }
  func.func @transform_0(%arg0: i32, %arg1: i32, %arg2: i32) -> (i32, i32, i32) {
    %c0_i32 = arith.constant 0 : i32
    %c0_i32_0 = arith.constant 0 : i32
    return %arg0, %c0_i32, %arg2 : i32, i32, i32
  }
  func.func @transform_1(%arg0: i32, %arg1: i32, %arg2: i32) -> (i32, i32) {
    %c0_i32 = arith.constant 0 : i32
    %c0_i32_0 = arith.constant 0 : i32
    return %arg1, %c0_i32 : i32, i32
  }
  func.func @transform_2(%arg0: i32, %arg1: i32, %arg2: i32) -> (i32, i32) {
    %c0_i32 = arith.constant 0 : i32
    %c0_i32_0 = arith.constant 0 : i32
    return %arg1, %c0_i32 : i32, i32
  }
  func.func @transform_3(%arg0: i32, %arg1: i32, %arg2: i32) -> (i32, i32) {
    %c0_i32 = arith.constant 0 : i32
    %c0_i32_0 = arith.constant 0 : i32
    return %arg1, %c0_i32 : i32, i32
  }
  func.func @transform_4(%arg0: i32, %arg1: i32, %arg2: i32) -> (i32, i32, i32) {
    %c0_i32 = arith.constant 0 : i32
    return %arg0, %arg1, %arg2 : i32, i32, i32
  }
}

</mosaic_0001>

<llo_original>
// kernel: tpu_custom_call.1
$region0: #{tpu_custom_call.1}
  #allocation0 [shape = 'u32[]', space=smem, size = 0x4, offset = 0x4, fixed_abs, tag = 'smem constant byte address 0x4 - core index']
  #allocation1 [shape = 'u32[72,128]{1,0:T(1,128)}', space=vmem, size = 0x9000, scoped, tag = 'internal scratch']
  %s0 = inlined_call_operand.vmem [shape: f32[2,4,256], index: 0, kind: input, shape index: {}]
  %s1 = inlined_call_operand.vmem [shape: f32[8,4], index: 1, kind: input, shape index: {}]
  %s2 = inlined_call_operand.vmem [shape: f32[8,1], index: 2, kind: input, shape index: {}]
  %s3 = inlined_call_operand.vmem [shape: f32[8,1], index: 3, kind: input, shape index: {}]
  %s4 = inlined_call_operand.hbm [shape: f32[2,8,256], index: 4, kind: output, shape index: {}]
  %s5 = sld [smem:[#allocation0]]
  $region49: #{tpu_custom_call.1} parent=0
    _
  %s7 = ssub.s32 1, %s5
  %s8 = scalar_select 0, %s7, %s5
  $region1: #{tpu_custom_call.1} parent=0
    #allocation2 [shape = 'u8[16384]{0}', space=vmem, size = 0x4000, scoped, tag = 'output window, operand 0']
    #allocation3 [shape = 's32[2]{0}', space=sflag, size = 0x8, scoped, tag = 'scoped memory for tpu_custom_call.1']
    %9 = vsyncpa [#allocation3], 0
    %s10 = scalar_lea.sflag [#allocation3], 1
    %11 = vsyncpa %s10, 0
    loop: start=0, step=1, limit=4
    $region2: #{tpu_custom_call.1} parent=1 // loop_pre_header
      _
    $region3: #{tpu_custom_call.1} parent=1 // loop_header
      %s13 = sphi 0, %s17
      %p14 = scmp.ge.s32.totalorder %s13, 4
      %s20 = sphi 0, %s39
      %s21 = sphi 0, %s35
      %s22 = sphi 0, %s31
      %s23 = sphi 0, %s20
      %s24 = sphi 0, %s21
      %s25 = sphi 0, %s22
      %s26 = sphi 0, %s23
      %s27 = sphi 0, %s24
      %s28 = sphi 0, %s25
      %s44 = sphi 0, %s46
      %s47 = sphi 0, %s44
      %s48 = sphi 0, %s47
      %s64 = sphi 0, %s48
      %s70 = sphi 0, %s72
      %s73 = sphi 0, %s70
      %s74 = sphi 0, %s73
      %s90 = sphi 0, %s74
      %s96 = sphi 0, %s98
      %s99 = sphi 0, %s96
      %s100 = sphi 0, %s99
      %s116 = sphi 0, %s100
      %s122 = sphi 0, %s124
      %s125 = sphi 0, %s122
      %s126 = sphi 0, %s125
      %s142 = sphi 0, %s126
      %s152 = sphi 0, %s154
      %s155 = sphi 0, %s152
      %s156 = sphi 0, %s155
      %s172 = sphi 0, %s156
    $region4: #{tpu_custom_call.1} parent=1 // loop_header_branch
      %16 = sbr.rel (%p14) target = $region8
    $region5: #{tpu_custom_call.1} parent=1 // loop_body
      %s18 = ssub.s32 %s13, 1
      %s19 = ssub.s32 %s13, 2
      %s29 = sadd.s32 1, %s22
      %p30 = scmp.ge.s32.totalorder %s29, 1
      %s31 = scalar_select %p30, 0, %s29
      %s32 = sadd.s32 1, %s21
      %s33 = scalar_select %p30, %s32, %s21
      %p34 = scmp.ge.s32.totalorder %s33, 1
      %s35 = scalar_select %p34, 0, %s33
      %s36 = sadd.s32 1, %s20
      %s37 = scalar_select %p34, %s36, %s20
      %p38 = scmp.ge.s32.totalorder %s37, 2
      %s39 = scalar_select %p38, 0, %s37
      %s40 = ssub.s32 %s20, %s39
      %s41 = ssub.s32 %s22, %s31
      %s42 = sor.u32 %s40, %s41
      %p43 = scmp.eq.s32.totalorder %s42, 0
      %s45 = sadd.s32 %s44, 1
      %s46 = scalar_select %p43, %s44, %s45
      %p49 = pneg %p43
      %p50 = scmp.eq.s32.totalorder %s13, 1
      %p51 = por %p49, %p50
      %p52 = scmp.ne.s32.totalorder %s44, %s47
      %p53 = scmp.eq.s32.totalorder %s13, 0
      %p54 = por %p52, %p53
      %p55 = scmp.ne.s32.totalorder %s44, %s47
      %p56 = scmp.eq.s32.totalorder %s18, 1
      %p57 = por %p55, %p56
      %p58 = scmp.ne.s32.totalorder %s47, %s48
      %p59 = scmp.eq.s32.totalorder %s18, 0
      %p60 = por %p58, %p59
      %p61 = scmp.ne.s32.totalorder %s47, %s48
      %p62 = scmp.eq.s32.totalorder %s19, 1
      %p63 = por %p61, %p62
      %p65 = scmp.ne.s32.totalorder %s48, %s64
      %p66 = scmp.eq.s32.totalorder %s19, 0
      %p67 = por %p65, %p66
      %s68 = ssub.s32 %s21, %s35
      %p69 = scmp.eq.s32.totalorder %s68, 0
      %s71 = sadd.s32 %s70, 1
      %s72 = scalar_select %p69, %s70, %s71
      %p75 = pneg %p69
      %p76 = scmp.eq.s32.totalorder %s13, 1
      %p77 = por %p75, %p76
      %p78 = scmp.ne.s32.totalorder %s70, %s73
      %p79 = scmp.eq.s32.totalorder %s13, 0
      %p80 = por %p78, %p79
      %p81 = scmp.ne.s32.totalorder %s70, %s73
      %p82 = scmp.eq.s32.totalorder %s18, 1
      %p83 = por %p81, %p82
      %p84 = scmp.ne.s32.totalorder %s73, %s74
      %p85 = scmp.eq.s32.totalorder %s18, 0
      %p86 = por %p84, %p85
      %p87 = scmp.ne.s32.totalorder %s73, %s74
      %p88 = scmp.eq.s32.totalorder %s19, 1
      %p89 = por %p87, %p88
      %p91 = scmp.ne.s32.totalorder %s74, %s90
      %p92 = scmp.eq.s32.totalorder %s19, 0
      %p93 = por %p91, %p92
      %s94 = ssub.s32 %s21, %s35
      %p95 = scmp.eq.s32.totalorder %s94, 0
      %s97 = sadd.s32 %s96, 1
      %s98 = scalar_select %p95, %s96, %s97
      %p101 = pneg %p95
      %p102 = scmp.eq.s32.totalorder %s13, 1
      %p103 = por %p101, %p102
      %p104 = scmp.ne.s32.totalorder %s96, %s99
      %p105 = scmp.eq.s32.totalorder %s13, 0
      %p106 = por %p104, %p105
      %p107 = scmp.ne.s32.totalorder %s96, %s99
      %p108 = scmp.eq.s32.totalorder %s18, 1
      %p109 = por %p107, %p108
      %p110 = scmp.ne.s32.totalorder %s99, %s100
      %p111 = scmp.eq.s32.totalorder %s18, 0
      %p112 = por %p110, %p111
      %p113 = scmp.ne.s32.totalorder %s99, %s100
      %p114 = scmp.eq.s32.totalorder %s19, 1
      %p115 = por %p113, %p114
      %p117 = scmp.ne.s32.totalorder %s100, %s116
      %p118 = scmp.eq.s32.totalorder %s19, 0
      %p119 = por %p117, %p118
      %s120 = ssub.s32 %s21, %s35
      %p121 = scmp.eq.s32.totalorder %s120, 0
      %s123 = sadd.s32 %s122, 1
      %s124 = scalar_select %p121, %s122, %s123
      %p127 = pneg %p121
      %p128 = scmp.eq.s32.totalorder %s13, 1
      %p129 = por %p127, %p128
      %p130 = scmp.ne.s32.totalorder %s122, %s125
      %p131 = scmp.eq.s32.totalorder %s13, 0
      %p132 = por %p130, %p131
      %p133 = scmp.ne.s32.totalorder %s122, %s125
      %p134 = scmp.eq.s32.totalorder %s18, 1
      %p135 = por %p133, %p134
      %p136 = scmp.ne.s32.totalorder %s125, %s126
      %p137 = scmp.eq.s32.totalorder %s18, 0
      %p138 = por %p136, %p137
      %p139 = scmp.ne.s32.totalorder %s125, %s126
      %p140 = scmp.eq.s32.totalorder %s19, 1
      %p141 = por %p139, %p140
      %p143 = scmp.ne.s32.totalorder %s126, %s142
      %p144 = scmp.eq.s32.totalorder %s19, 0
      %p145 = por %p143, %p144
      %s146 = ssub.s32 %s20, %s39
      %s147 = ssub.s32 %s21, %s35
      %s148 = sor.u32 %s146, %s147
      %s149 = ssub.s32 %s22, %s31
      %s150 = sor.u32 %s148, %s149
      %p151 = scmp.eq.s32.totalorder %s150, 0
      %s153 = sadd.s32 %s152, 1
      %s154 = scalar_select %p151, %s152, %s153
      %p157 = pneg %p151
      %p158 = scmp.eq.s32.totalorder %s13, 1
      %p159 = por %p157, %p158
      %p160 = scmp.ne.s32.totalorder %s152, %s155
      %p161 = scmp.eq.s32.totalorder %s13, 0
      %p162 = por %p160, %p161
      %p163 = scmp.ne.s32.totalorder %s152, %s155
      %p164 = scmp.eq.s32.totalorder %s18, 1
      %p165 = por %p163, %p164
      %p166 = scmp.ne.s32.totalorder %s155, %s156
      %p167 = scmp.eq.s32.totalorder %s18, 0
      %p168 = por %p166, %p167
      %p169 = scmp.ne.s32.totalorder %s155, %s156
      %p170 = scmp.eq.s32.totalorder %s19, 1
      %p171 = por %p169, %p170
      %p173 = scmp.ne.s32.totalorder %s156, %s172
      %p174 = scmp.eq.s32.totalorder %s19, 0
      %p175 = por %p173, %p174
      %p176 = scmp.le.s32.totalorder 1, %s13
      %p177 = scmp.lt.s32.totalorder %s13, 3
      %p178 = pnand %p176, %p177
      %p179 = pneg %p178
      // Predicated region
      $region9: #{tpu_custom_call.1} parent=5 // pred_check
        _
      $region10: #{tpu_custom_call.1} parent=5 // pred_check_branch
        %181 = sbr.rel (%p178) target = $region12
      $region11: #{tpu_custom_call.1} parent=5 // pred_region
        %s182 = ssub.s32 %s13, 1
        // Predicated region
        $region13: #{tpu_custom_call.1} parent=11 // pred_check
          %p183 = pneg %p86
        $region14: #{tpu_custom_call.1} parent=11 // pred_check_branch
          %185 = sbr.rel (%p183) target = $region16
        $region15: #{tpu_custom_call.1} parent=11 // pred_region
          %p186 = scmp.lt.s32.totalorder %s24, 0
          %s187 = scalar_select %p186, %s24, 0
          %s188 = smul.addr %s187, 8
          %s189 = scalar_lea.vmem %s1, %s188
        $region16: #{tpu_custom_call.1} parent=11 // pred_fallthru
          _
        // Predicated region
        $region17: #{tpu_custom_call.1} parent=11 // pred_check
          %p190 = pneg %p112
        $region18: #{tpu_custom_call.1} parent=11 // pred_check_branch
          %192 = sbr.rel (%p190) target = $region20
        $region19: #{tpu_custom_call.1} parent=11 // pred_region
          %p193 = scmp.lt.s32.totalorder %s24, 0
          %s194 = scalar_select %p193, %s24, 0
          %s195 = smul.addr %s194, 8
          %s196 = scalar_lea.vmem %s2, %s195
        $region20: #{tpu_custom_call.1} parent=11 // pred_fallthru
          _
        // Predicated region
        $region21: #{tpu_custom_call.1} parent=11 // pred_check
          %p197 = pneg %p138
        $region22: #{tpu_custom_call.1} parent=11 // pred_check_branch
          %199 = sbr.rel (%p197) target = $region24
        $region23: #{tpu_custom_call.1} parent=11 // pred_region
          %p200 = scmp.lt.s32.totalorder %s24, 0
          %s201 = scalar_select %p200, %s24, 0
          %s202 = smul.addr %s201, 8
          %s203 = scalar_lea.vmem %s3, %s202
        $region24: #{tpu_custom_call.1} parent=11 // pred_fallthru
          _
      $region12: #{tpu_custom_call.1} parent=5 // pred_fallthru
        _
      %p204 = scmp.lt.s32.totalorder %s13, 2
      // Predicated region
      $region25: #{tpu_custom_call.1} parent=5 // pred_check
        %p205 = pneg %p204
      $region26: #{tpu_custom_call.1} parent=5 // pred_check_branch
        %207 = sbr.rel (%p205) target = $region28
      $region27: #{tpu_custom_call.1} parent=5 // pred_region
        // Predicated region
        $region29: #{tpu_custom_call.1} parent=27 // pred_check
          %p208 = pneg %p54
        $region30: #{tpu_custom_call.1} parent=27 // pred_check_branch
          %210 = sbr.rel (%p208) target = $region32
        $region31: #{tpu_custom_call.1} parent=27 // pred_region
          %s211 = smul.u32 2, %s22
          %p212 = scmp.lt.s32.totalorder %s20, 1
          %s213 = scalar_select %p212, %s20, 1
          %p214 = scmp.lt.s32.totalorder %s211, 1
          %s215 = scalar_select %p214, %s211, 1
          %s216 = smul.addr %s213, 2
          %s217 = sadd.s32 %s215, %s216
          %s218 = smul.addr %s217, 4
          %s219 = scalar_lea.vmem %s0, %s218
          %s220 = smul.u32 2, %s22
        $region32: #{tpu_custom_call.1} parent=27 // pred_fallthru
          _
      $region28: #{tpu_custom_call.1} parent=5 // pred_fallthru
        _
      %p221 = scmp.le.s32.totalorder 1, %s13
      %p222 = scmp.lt.s32.totalorder %s13, 3
      %p223 = pnand %p221, %p222
      %p224 = pneg %p223
      // Predicated region
      $region33: #{tpu_custom_call.1} parent=5 // pred_check
        _
      $region34: #{tpu_custom_call.1} parent=5 // pred_check_branch
        %226 = sbr.rel (%p223) target = $region36
      $region35: #{tpu_custom_call.1} parent=5 // pred_region
        %s227 = ssub.s32 %s13, 1
        %s228 = smul.u32 2, %s25
        %p229 = scmp.lt.s32.totalorder %s23, 1
        %s230 = scalar_select %p229, %s23, 1
        %p231 = scmp.lt.s32.totalorder %s228, 1
        %s232 = scalar_select %p231, %s228, 1
        %s233 = smul.addr %s230, 2
        %s234 = sadd.s32 %s232, %s233
        %s235 = smul.addr %s234, 4
        %s236 = scalar_lea.vmem %s0, %s235
        %p237 = pneg %p60
        %p238 = pneg %p57
        %p239 = scmp.lt.s32.totalorder %s24, 0
        %s240 = scalar_select %p239, %s24, 0
        %s241 = smul.addr %s240, 8
        %s242 = scalar_lea.vmem %s1, %s241
        %p243 = pneg %p86
        %p244 = pneg %p83
        %p245 = scmp.lt.s32.totalorder %s24, 0
        %s246 = scalar_select %p245, %s24, 0
        %s247 = smul.addr %s246, 8
        %s248 = scalar_lea.vmem %s2, %s247
        %p249 = pneg %p112
        %p250 = pneg %p109
        %p251 = scmp.lt.s32.totalorder %s24, 0
        %s252 = scalar_select %p251, %s24, 0
        %s253 = smul.addr %s252, 8
        %s254 = scalar_lea.vmem %s3, %s253
        %p255 = pneg %p138
        %p256 = pneg %p135
        %p257 = pneg %p168
        %p258 = pneg %p165
        %s259 = sand.u32 %s155, 1
        %s260 = scalar_lea.sflag [#allocation3], %s259
        %s261 = sand.u32 %s155, 1
        %s262 = smul.addr %s261, 16
        %s263 = scalar_lea.vmem [#allocation2], %s262
        %s264 = smul.u32 2, %s25
        %p265 = scmp.lt.s32.totalorder %s23, 1
        %s266 = scalar_select %p265, %s23, 1
        %p267 = scmp.lt.s32.totalorder %s264, 1
        %s268 = scalar_select %p267, %s264, 1
        %s269 = smul.addr %s266, 2
        %s270 = sadd.s32 %s268, %s269
        %s271 = smul.addr %s270, 4
        %s272 = scalar_lea.vmem %s0, %s271
        %s273 = smul.u32 2, %s25
        %p274 = scmp.lt.s32.totalorder %s24, 0
        %s275 = scalar_select %p274, %s24, 0
        %s276 = smul.addr %s275, 8
        %s277 = scalar_lea.vmem %s1, %s276
        %p278 = scmp.lt.s32.totalorder %s24, 0
        %s279 = scalar_select %p278, %s24, 0
        %s280 = smul.addr %s279, 8
        %s281 = scalar_lea.vmem %s2, %s280
        %p282 = scmp.lt.s32.totalorder %s24, 0
        %s283 = scalar_select %p282, %s24, 0
        %s284 = smul.addr %s283, 8
        %s285 = scalar_lea.vmem %s3, %s284
        %s286 = smul.u32 2, %s25
        %v287 = vld [vmem:[%s277] sm:$0xff]
        %v288 = vld [vmem:[%s281] sm:$0xff]
        %290 = vset.pattern.permute.xlu0 0
        %291 = vperm.xlu0 %290, %v288
        %v292 = vpop.permute.xlu0 %291
        %v294 = vmul.f32 %v287, %v292
        %v295 = vld [vmem:[%s285] sm:$0xff]
        %v296 = vld [vmem:[%s272] sm:$0xff]
        %298 = vset.pattern.permute.xlu0 0
        %299 = vperm.xlu0 %298, %v294
        %v300 = vpop.permute.xlu0 %299
        %v303 = vperm.slane %v296, 0
        %v304 = vperm.slane %v296, 4
        %v307 = vperm.slane %v303, 0
        %v308 = vperm.slane %v304, 0
        %v309 = vmul.f32 %v300, %v307
        %v310 = vmul.f32 %v300, %v308
        %311 = vset.pattern.permute.xlu0 1
        %312 = vperm.xlu0 %311, %v294
        %v313 = vpop.permute.xlu0 %312
        %v315 = vperm.slane %v296, 1
        %v316 = vperm.slane %v296, 5
        %v319 = vperm.slane %v315, 1
        %v320 = vperm.slane %v316, 1
        %v321 = vmul.f32 %v313, %v319
        %v322 = vmul.f32 %v313, %v320
        %v323 = vadd.f32 %v309, %v321
        %v324 = vadd.f32 %v310, %v322
        %325 = vset.pattern.permute.xlu0 2
        %326 = vperm.xlu0 %325, %v294
        %v327 = vpop.permute.xlu0 %326
        %v329 = vperm.slane %v296, 2
        %v330 = vperm.slane %v296, 6
        %v333 = vperm.slane %v329, 2
        %v334 = vperm.slane %v330, 2
        %v335 = vmul.f32 %v327, %v333
        %v336 = vmul.f32 %v327, %v334
        %v337 = vadd.f32 %v323, %v335
        %v338 = vadd.f32 %v324, %v336
        %339 = vset.pattern.permute.xlu0 3
        %340 = vperm.xlu0 %339, %v294
        %v341 = vpop.permute.xlu0 %340
        %v343 = vperm.slane %v296, 3
        %v344 = vperm.slane %v296, 7
        %v347 = vperm.slane %v343, 3
        %v348 = vperm.slane %v344, 3
        %v349 = vmul.f32 %v341, %v347
        %v350 = vmul.f32 %v341, %v348
        %v351 = vadd.f32 %v337, %v349
        %v352 = vadd.f32 %v338, %v350
        %354 = vset.pattern.permute.xlu0 0
        %355 = vperm.xlu0 %354, %v295
        %v356 = vpop.permute.xlu0 %355
        %v358 = vadd.f32 %v351, %v356
        %v359 = vadd.f32 %v352, %v356
        %v360 = vmax.f32 %v358, 0.0
        %v361 = vmax.f32 %v359, 0.0
        %362 = vst [vmem:[%s263] sm:$0xff] %v360
        %363 = vst [vmem:[%s263 + $0x8] sm:$0xff] %v361
        %s364 = sand.u32 %s155, 1
        %s365 = scalar_lea.sflag [#allocation3], %s364
        %s366 = sand.u32 %s155, 1
        %s367 = smul.addr %s366, 16
        %s368 = scalar_lea.vmem [#allocation2], %s367
        // Predicated region
        $region37: #{tpu_custom_call.1} parent=35 // pred_check
          %p369 = pneg %p165
        $region38: #{tpu_custom_call.1} parent=35 // pred_check_branch
          %371 = sbr.rel (%p369) target = $region40
        $region39: #{tpu_custom_call.1} parent=35 // pred_region
          %s372 = smul.u32 2, %s25
          %374 = vsyncadd %s365, 0
          %s375 = smul.addr %s24, 2
          %s376 = sadd.s32 %s372, %s375
          %s377 = smul.addr %s23, 2
          %s378 = sadd.s32 %s376, %s377
          %s379 = smul.addr %s378, 8
          %s380 = scalar_lea.hbm %s4, %s379
          %s382 = sshll.u32 %s368, 4
          %s383 = int_to_ptr.vmem [resolvable:$true] %s382
          %s384 = sshll.u32 %s380, 4
          %s385 = int_to_ptr.hbm [resolvable:$true] %s384
          %387 = dma.vmem_to_hbm [thread:$0]  %s383, 256, %s385, %s365
        $region40: #{tpu_custom_call.1} parent=35 // pred_fallthru
          _
      $region36: #{tpu_custom_call.1} parent=5 // pred_fallthru
        _
      %p388 = scmp.le.s32.totalorder 2, %s13
      // Predicated region
      $region41: #{tpu_custom_call.1} parent=5 // pred_check
        %p389 = pneg %p388
      $region42: #{tpu_custom_call.1} parent=5 // pred_check_branch
        %391 = sbr.rel (%p389) target = $region44
      $region43: #{tpu_custom_call.1} parent=5 // pred_region
        %s392 = ssub.s32 %s13, 2
        // Predicated region
        $region45: #{tpu_custom_call.1} parent=43 // pred_check
          %p393 = pneg %p171
        $region46: #{tpu_custom_call.1} parent=43 // pred_check_branch
          %395 = sbr.rel (%p393) target = $region48
        $region47: #{tpu_custom_call.1} parent=43 // pred_region
          %s396 = sand.u32 %s156, 1
          %s397 = scalar_lea.sflag [#allocation3], %s396
          %s398 = sand.u32 %s156, 1
          %s399 = smul.addr %s398, 16
          %s400 = scalar_lea.vmem [#allocation2], %s399
          %402 = dma.done %s397, 256
        $region48: #{tpu_custom_call.1} parent=43 // pred_fallthru
          _
      $region44: #{tpu_custom_call.1} parent=5 // pred_fallthru
        _
    $region6: #{tpu_custom_call.1} parent=1 // loop_footer
      %s17 = sadd.s32 1, %s13
    $region7: #{tpu_custom_call.1} parent=1 // loop_footer_branch
      %12 = sbr.rel target = $region3
    $region8: #{tpu_custom_call.1} parent=1 // loop_exit
      _
    %403 = vsyncpa [#allocation3], 1
    %s404 = scalar_lea.sflag [#allocation3], 1
    %405 = vsyncpa %s404, 1

// kernel: tpu_custom_call.1
$region0: #{tpu_custom_call.1}
  #allocation0 [shape = 'u32[]', space=smem, size = 0x4, offset = 0x4, fixed_abs, tag = 'smem constant byte address 0x4 - core index']
  #allocation1 [shape = 'u32[72,128]{1,0:T(1,128)}', space=vmem, size = 0x9000, scoped, tag = 'internal scratch']
  %s0 = inlined_call_operand.vmem [shape: f32[2,4,256], index: 0, kind: input, shape index: {}]
  %s1 = inlined_call_operand.vmem [shape: f32[8,4], index: 1, kind: input, shape index: {}]
  %s2 = inlined_call_operand.vmem [shape: f32[8,1], index: 2, kind: input, shape index: {}]
  %s3 = inlined_call_operand.vmem [shape: f32[8,1], index: 3, kind: input, shape index: {}]
  %s4 = inlined_call_operand.hbm [shape: f32[2,8,256], index: 4, kind: output, shape index: {}]
  %s5 = sld [smem:[#allocation0]]
  $region49: #{tpu_custom_call.1} parent=0
    _
  %s7 = ssub.s32 1, %s5
  %s8 = scalar_select 0, %s7, %s5
  $region1: #{tpu_custom_call.1} parent=0
    #allocation2 [shape = 'u8[16384]{0}', space=vmem, size = 0x4000, scoped, tag = 'output window, operand 0']
    #allocation3 [shape = 's32[2]{0}', space=sflag, size = 0x8, scoped, tag = 'scoped memory for tpu_custom_call.1']
    %9 = vsyncpa [#allocation3], 0
    %s10 = scalar_lea.sflag [#allocation3], 1
    %11 = vsyncpa %s10, 0
    loop: start=0, step=1, limit=4
    $region2: #{tpu_custom_call.1} parent=1 // loop_pre_header
      _
    $region3: #{tpu_custom_call.1} parent=1 // loop_header
      %s13 = sphi 0, %s17
      %p14 = scmp.ge.s32.totalorder %s13, 4
      %s20 = sphi 0, %s39
      %s21 = sphi 0, %s35
      %s22 = sphi 0, %s31
      %s23 = sphi 0, %s20
      %s24 = sphi 0, %s21
      %s25 = sphi 0, %s22
      %s26 = sphi 0, %s23
      %s27 = sphi 0, %s24
      %s28 = sphi 0, %s25
      %s44 = sphi 0, %s46
      %s47 = sphi 0, %s44
      %s48 = sphi 0, %s47
      %s64 = sphi 0, %s48
      %s70 = sphi 0, %s72
      %s73 = sphi 0, %s70
      %s74 = sphi 0, %s73
      %s90 = sphi 0, %s74
      %s96 = sphi 0, %s98
      %s99 = sphi 0, %s96
      %s100 = sphi 0, %s99
      %s116 = sphi 0, %s100
      %s122 = sphi 0, %s124
      %s125 = sphi 0, %s122
      %s126 = sphi 0, %s125
      %s142 = sphi 0, %s126
      %s152 = sphi 0, %s154
      %s155 = sphi 0, %s152
      %s156 = sphi 0, %s155
      %s172 = sphi 0, %s156
    $region4: #{tpu_custom_call.1} parent=1 // loop_header_branch
      %16 = sbr.rel (%p14) target = $region8
    $region5: #{tpu_custom_call.1} parent=1 // loop_body
      %s18 = ssub.s32 %s13, 1
      %s19 = ssub.s32 %s13, 2
      %s29 = sadd.s32 1, %s22
      %p30 = scmp.ge.s32.totalorder %s29, 1
      %s31 = scalar_select %p30, 0, %s29
      %s32 = sadd.s32 1, %s21
      %s33 = scalar_select %p30, %s32, %s21
      %p34 = scmp.ge.s32.totalorder %s33, 1
      %s35 = scalar_select %p34, 0, %s33
      %s36 = sadd.s32 1, %s20
      %s37 = scalar_select %p34, %s36, %s20
      %p38 = scmp.ge.s32.totalorder %s37, 2
      %s39 = scalar_select %p38, 0, %s37
      %s40 = ssub.s32 %s20, %s39
      %s41 = ssub.s32 %s22, %s31
      %s42 = sor.u32 %s40, %s41
      %p43 = scmp.eq.s32.totalorder %s42, 0
      %s45 = sadd.s32 %s44, 1
      %s46 = scalar_select %p43, %s44, %s45
      %p49 = pneg %p43
      %p50 = scmp.eq.s32.totalorder %s13, 1
      %p51 = por %p49, %p50
      %p52 = scmp.ne.s32.totalorder %s44, %s47
      %p53 = scmp.eq.s32.totalorder %s13, 0
      %p54 = por %p52, %p53
      %p55 = scmp.ne.s32.totalorder %s44, %s47
      %p56 = scmp.eq.s32.totalorder %s18, 1
      %p57 = por %p55, %p56
      %p58 = scmp.ne.s32.totalorder %s47, %s48
      %p59 = scmp.eq.s32.totalorder %s18, 0
      %p60 = por %p58, %p59
      %p61 = scmp.ne.s32.totalorder %s47, %s48
      %p62 = scmp.eq.s32.totalorder %s19, 1
      %p63 = por %p61, %p62
      %p65 = scmp.ne.s32.totalorder %s48, %s64
      %p66 = scmp.eq.s32.totalorder %s19, 0
      %p67 = por %p65, %p66
      %s68 = ssub.s32 %s21, %s35
      %p69 = scmp.eq.s32.totalorder %s68, 0
      %s71 = sadd.s32 %s70, 1
      %s72 = scalar_select %p69, %s70, %s71
      %p75 = pneg %p69
      %p76 = scmp.eq.s32.totalorder %s13, 1
      %p77 = por %p75, %p76
      %p78 = scmp.ne.s32.totalorder %s70, %s73
      %p79 = scmp.eq.s32.totalorder %s13, 0
      %p80 = por %p78, %p79
      %p81 = scmp.ne.s32.totalorder %s70, %s73
      %p82 = scmp.eq.s32.totalorder %s18, 1
      %p83 = por %p81, %p82
      %p84 = scmp.ne.s32.totalorder %s73, %s74
      %p85 = scmp.eq.s32.totalorder %s18, 0
      %p86 = por %p84, %p85
      %p87 = scmp.ne.s32.totalorder %s73, %s74
      %p88 = scmp.eq.s32.totalorder %s19, 1
      %p89 = por %p87, %p88
      %p91 = scmp.ne.s32.totalorder %s74, %s90
      %p92 = scmp.eq.s32.totalorder %s19, 0
      %p93 = por %p91, %p92
      %s94 = ssub.s32 %s21, %s35
      %p95 = scmp.eq.s32.totalorder %s94, 0
      %s97 = sadd.s32 %s96, 1
      %s98 = scalar_select %p95, %s96, %s97
      %p101 = pneg %p95
      %p102 = scmp.eq.s32.totalorder %s13, 1
      %p103 = por %p101, %p102
      %p104 = scmp.ne.s32.totalorder %s96, %s99
      %p105 = scmp.eq.s32.totalorder %s13, 0
      %p106 = por %p104, %p105
      %p107 = scmp.ne.s32.totalorder %s96, %s99
      %p108 = scmp.eq.s32.totalorder %s18, 1
      %p109 = por %p107, %p108
      %p110 = scmp.ne.s32.totalorder %s99, %s100
      %p111 = scmp.eq.s32.totalorder %s18, 0
      %p112 = por %p110, %p111
      %p113 = scmp.ne.s32.totalorder %s99, %s100
      %p114 = scmp.eq.s32.totalorder %s19, 1
      %p115 = por %p113, %p114
      %p117 = scmp.ne.s32.totalorder %s100, %s116
      %p118 = scmp.eq.s32.totalorder %s19, 0
      %p119 = por %p117, %p118
      %s120 = ssub.s32 %s21, %s35
      %p121 = scmp.eq.s32.totalorder %s120, 0
      %s123 = sadd.s32 %s122, 1
      %s124 = scalar_select %p121, %s122, %s123
      %p127 = pneg %p121
      %p128 = scmp.eq.s32.totalorder %s13, 1
      %p129 = por %p127, %p128
      %p130 = scmp.ne.s32.totalorder %s122, %s125
      %p131 = scmp.eq.s32.totalorder %s13, 0
      %p132 = por %p130, %p131
      %p133 = scmp.ne.s32.totalorder %s122, %s125
      %p134 = scmp.eq.s32.totalorder %s18, 1
      %p135 = por %p133, %p134
      %p136 = scmp.ne.s32.totalorder %s125, %s126
      %p137 = scmp.eq.s32.totalorder %s18, 0
      %p138 = por %p136, %p137
      %p139 = scmp.ne.s32.totalorder %s125, %s126
      %p140 = scmp.eq.s32.totalorder %s19, 1
      %p141 = por %p139, %p140
      %p143 = scmp.ne.s32.totalorder %s126, %s142
      %p144 = scmp.eq.s32.totalorder %s19, 0
      %p145 = por %p143, %p144
      %s146 = ssub.s32 %s20, %s39
      %s147 = ssub.s32 %s21, %s35
      %s148 = sor.u32 %s146, %s147
      %s149 = ssub.s32 %s22, %s31
      %s150 = sor.u32 %s148, %s149
      %p151 = scmp.eq.s32.totalorder %s150, 0
      %s153 = sadd.s32 %s152, 1
      %s154 = scalar_select %p151, %s152, %s153
      %p157 = pneg %p151
      %p158 = scmp.eq.s32.totalorder %s13, 1
      %p159 = por %p157, %p158
      %p160 = scmp.ne.s32.totalorder %s152, %s155
      %p161 = scmp.eq.s32.totalorder %s13, 0
      %p162 = por %p160, %p161
      %p163 = scmp.ne.s32.totalorder %s152, %s155
      %p164 = scmp.eq.s32.totalorder %s18, 1
      %p165 = por %p163, %p164
      %p166 = scmp.ne.s32.totalorder %s155, %s156
      %p167 = scmp.eq.s32.totalorder %s18, 0
      %p168 = por %p166, %p167
      %p169 = scmp.ne.s32.totalorder %s155, %s156
      %p170 = scmp.eq.s32.totalorder %s19, 1
      %p171 = por %p169, %p170
      %p173 = scmp.ne.s32.totalorder %s156, %s172
      %p174 = scmp.eq.s32.totalorder %s19, 0
      %p175 = por %p173, %p174
      %p176 = scmp.le.s32.totalorder 1, %s13
      %p177 = scmp.lt.s32.totalorder %s13, 3
      %p178 = pnand %p176, %p177
      %p179 = pneg %p178
      // Predicated region
      $region9: #{tpu_custom_call.1} parent=5 // pred_check
        _
      $region10: #{tpu_custom_call.1} parent=5 // pred_check_branch
        %181 = sbr.rel (%p178) target = $region12
      $region11: #{tpu_custom_call.1} parent=5 // pred_region
        %s182 = ssub.s32 %s13, 1
        // Predicated region
        $region13: #{tpu_custom_call.1} parent=11 // pred_check
          %p183 = pneg %p86
        $region14: #{tpu_custom_call.1} parent=11 // pred_check_branch
          %185 = sbr.rel (%p183) target = $region16
        $region15: #{tpu_custom_call.1} parent=11 // pred_region
          %p186 = scmp.lt.s32.totalorder %s24, 0
          %s187 = scalar_select %p186, %s24, 0
          %s188 = smul.addr %s187, 8
          %s189 = scalar_lea.vmem %s1, %s188
        $region16: #{tpu_custom_call.1} parent=11 // pred_fallthru
          _
        // Predicated region
        $region17: #{tpu_custom_call.1} parent=11 // pred_check
          %p190 = pneg %p112
        $region18: #{tpu_custom_call.1} parent=11 // pred_check_branch
          %192 = sbr.rel (%p190) target = $region20
        $region19: #{tpu_custom_call.1} parent=11 // pred_region
          %p193 = scmp.lt.s32.totalorder %s24, 0
          %s194 = scalar_select %p193, %s24, 0
          %s195 = smul.addr %s194, 8
          %s196 = scalar_lea.vmem %s2, %s195
        $region20: #{tpu_custom_call.1} parent=11 // pred_fallthru
          _
        // Predicated region
        $region21: #{tpu_custom_call.1} parent=11 // pred_check
          %p197 = pneg %p138
        $region22: #{tpu_custom_call.1} parent=11 // pred_check_branch
          %199 = sbr.rel (%p197) target = $region24
        $region23: #{tpu_custom_call.1} parent=11 // pred_region
          %p200 = scmp.lt.s32.totalorder %s24, 0
          %s201 = scalar_select %p200, %s24, 0
          %s202 = smul.addr %s201, 8
          %s203 = scalar_lea.vmem %s3, %s202
        $region24: #{tpu_custom_call.1} parent=11 // pred_fallthru
          _
      $region12: #{tpu_custom_call.1} parent=5 // pred_fallthru
        _
      %p204 = scmp.lt.s32.totalorder %s13, 2
      // Predicated region
      $region25: #{tpu_custom_call.1} parent=5 // pred_check
        %p205 = pneg %p204
      $region26: #{tpu_custom_call.1} parent=5 // pred_check_branch
        %207 = sbr.rel (%p205) target = $region28
      $region27: #{tpu_custom_call.1} parent=5 // pred_region
        // Predicated region
        $region29: #{tpu_custom_call.1} parent=27 // pred_check
          %p208 = pneg %p54
        $region30: #{tpu_custom_call.1} parent=27 // pred_check_branch
          %210 = sbr.rel (%p208) target = $region32
        $region31: #{tpu_custom_call.1} parent=27 // pred_region
          %s211 = smul.u32 2, %s22
          %p212 = scmp.lt.s32.totalorder %s20, 1
          %s213 = scalar_select %p212, %s20, 1
          %p214 = scmp.lt.s32.totalorder %s211, 1
          %s215 = scalar_select %p214, %s211, 1
          %s216 = smul.addr %s213, 2
          %s217 = sadd.s32 %s215, %s216
          %s218 = smul.addr %s217, 4
          %s219 = scalar_lea.vmem %s0, %s218
          %s220 = smul.u32 2, %s22
        $region32: #{tpu_custom_call.1} parent=27 // pred_fallthru
          _
      $region28: #{tpu_custom_call.1} parent=5 // pred_fallthru
        _
      %p221 = scmp.le.s32.totalorder 1, %s13
      %p222 = scmp.lt.s32.totalorder %s13, 3
      %p223 = pnand %p221, %p222
      %p224 = pneg %p223
      // Predicated region
      $region33: #{tpu_custom_call.1} parent=5 // pred_check
        _
      $region34: #{tpu_custom_call.1} parent=5 // pred_check_branch
        %226 = sbr.rel (%p223) target = $region36
      $region35: #{tpu_custom_call.1} parent=5 // pred_region
        %s227 = ssub.s32 %s13, 1
        %s228 = smul.u32 2, %s25
        %p229 = scmp.lt.s32.totalorder %s23, 1
        %s230 = scalar_select %p229, %s23, 1
        %p231 = scmp.lt.s32.totalorder %s228, 1
        %s232 = scalar_select %p231, %s228, 1
        %s233 = smul.addr %s230, 2
        %s234 = sadd.s32 %s232, %s233
        %s235 = smul.addr %s234, 4
        %s236 = scalar_lea.vmem %s0, %s235
        %p237 = pneg %p60
        %p238 = pneg %p57
        %p239 = scmp.lt.s32.totalorder %s24, 0
        %s240 = scalar_select %p239, %s24, 0
        %s241 = smul.addr %s240, 8
        %s242 = scalar_lea.vmem %s1, %s241
        %p243 = pneg %p86
        %p244 = pneg %p83
        %p245 = scmp.lt.s32.totalorder %s24, 0
        %s246 = scalar_select %p245, %s24, 0
        %s247 = smul.addr %s246, 8
        %s248 = scalar_lea.vmem %s2, %s247
        %p249 = pneg %p112
        %p250 = pneg %p109
        %p251 = scmp.lt.s32.totalorder %s24, 0
        %s252 = scalar_select %p251, %s24, 0
        %s253 = smul.addr %s252, 8
        %s254 = scalar_lea.vmem %s3, %s253
        %p255 = pneg %p138
        %p256 = pneg %p135
        %p257 = pneg %p168
        %p258 = pneg %p165
        %s259 = sand.u32 %s155, 1
        %s260 = scalar_lea.sflag [#allocation3], %s259
        %s261 = sand.u32 %s155, 1
        %s262 = smul.addr %s261, 16
        %s263 = scalar_lea.vmem [#allocation2], %s262
        %s264 = smul.u32 2, %s25
        %p265 = scmp.lt.s32.totalorder %s23, 1
        %s266 = scalar_select %p265, %s23, 1
        %p267 = scmp.lt.s32.totalorder %s264, 1
        %s268 = scalar_select %p267, %s264, 1
        %s269 = smul.addr %s266, 2
        %s270 = sadd.s32 %s268, %s269
        %s271 = smul.addr %s270, 4
        %s272 = scalar_lea.vmem %s0, %s271
        %s273 = smul.u32 2, %s25
        %p274 = scmp.lt.s32.totalorder %s24, 0
        %s275 = scalar_select %p274, %s24, 0
        %s276 = smul.addr %s275, 8
        %s277 = scalar_lea.vmem %s1, %s276
        %p278 = scmp.lt.s32.totalorder %s24, 0
        %s279 = scalar_select %p278, %s24, 0
        %s280 = smul.addr %s279, 8
        %s281 = scalar_lea.vmem %s2, %s280
        %p282 = scmp.lt.s32.totalorder %s24, 0
        %s283 = scalar_select %p282, %s24, 0
        %s284 = smul.addr %s283, 8
        %s285 = scalar_lea.vmem %s3, %s284
        %s286 = smul.u32 2, %s25
        %v287 = vld [vmem:[%s277] sm:$0xff]
        %v288 = vld [vmem:[%s281] sm:$0xff]
        %290 = vset.pattern.permute.xlu0 0
        %291 = vperm.xlu0 %290, %v288
        %v292 = vpop.permute.xlu0 %291
        %v294 = vmul.f32 %v287, %v292
        %v295 = vld [vmem:[%s285] sm:$0xff]
        %v296 = vld [vmem:[%s272] sm:$0xff]
        %298 = vset.pattern.permute.xlu0 0
        %299 = vperm.xlu0 %298, %v294
        %v300 = vpop.permute.xlu0 %299
        %v303 = vperm.slane %v296, 0
        %v304 = vperm.slane %v296, 4
        %v307 = vperm.slane %v303, 0
        %v308 = vperm.slane %v304, 0
        %v309 = vmul.f32 %v300, %v307
        %v310 = vmul.f32 %v300, %v308
        %311 = vset.pattern.permute.xlu0 1
        %312 = vperm.xlu0 %311, %v294
        %v313 = vpop.permute.xlu0 %312
        %v315 = vperm.slane %v296, 1
        %v316 = vperm.slane %v296, 5
        %v319 = vperm.slane %v315, 1
        %v320 = vperm.slane %v316, 1
        %v321 = vmul.f32 %v313, %v319
        %v322 = vmul.f32 %v313, %v320
        %v323 = vadd.f32 %v309, %v321
        %v324 = vadd.f32 %v310, %v322
        %325 = vset.pattern.permute.xlu0 2
        %326 = vperm.xlu0 %325, %v294
        %v327 = vpop.permute.xlu0 %326
        %v329 = vperm.slane %v296, 2
        %v330 = vperm.slane %v296, 6
        %v333 = vperm.slane %v329, 2
        %v334 = vperm.slane %v330, 2
        %v335 = vmul.f32 %v327, %v333
        %v336 = vmul.f32 %v327, %v334
        %v337 = vadd.f32 %v323, %v335
        %v338 = vadd.f32 %v324, %v336
        %339 = vset.pattern.permute.xlu0 3
        %340 = vperm.xlu0 %339, %v294
        %v341 = vpop.permute.xlu0 %340
        %v343 = vperm.slane %v296, 3
        %v344 = vperm.slane %v296, 7
        %v347 = vperm.slane %v343, 3
        %v348 = vperm.slane %v344, 3
        %v349 = vmul.f32 %v341, %v347
        %v350 = vmul.f32 %v341, %v348
        %v351 = vadd.f32 %v337, %v349
        %v352 = vadd.f32 %v338, %v350
        %354 = vset.pattern.permute.xlu0 0
        %355 = vperm.xlu0 %354, %v295
        %v356 = vpop.permute.xlu0 %355
        %v358 = vadd.f32 %v351, %v356
        %v359 = vadd.f32 %v352, %v356
        %v360 = vmax.f32 %v358, 0.0
        %v361 = vmax.f32 %v359, 0.0
        %362 = vst [vmem:[%s263] sm:$0xff] %v360
        %363 = vst [vmem:[%s263 + $0x8] sm:$0xff] %v361
        %s364 = sand.u32 %s155, 1
        %s365 = scalar_lea.sflag [#allocation3], %s364
        %s366 = sand.u32 %s155, 1
        %s367 = smul.addr %s366, 16
        %s368 = scalar_lea.vmem [#allocation2], %s367
        // Predicated region
        $region37: #{tpu_custom_call.1} parent=35 // pred_check
          %p369 = pneg %p165
        $region38: #{tpu_custom_call.1} parent=35 // pred_check_branch
          %371 = sbr.rel (%p369) target = $region40
        $region39: #{tpu_custom_call.1} parent=35 // pred_region
          %s372 = smul.u32 2, %s25
          %374 = vsyncadd %s365, 0
          %s375 = smul.addr %s24, 2
          %s376 = sadd.s32 %s372, %s375
          %s377 = smul.addr %s23, 2
          %s378 = sadd.s32 %s376, %s377
          %s379 = smul.addr %s378, 8
          %s380 = scalar_lea.hbm %s4, %s379
          %s382 = sshll.u32 %s368, 4
          %s383 = int_to_ptr.vmem [resolvable:$true] %s382
          %s384 = sshll.u32 %s380, 4
          %s385 = int_to_ptr.hbm [resolvable:$true] %s384
          %387 = dma.vmem_to_hbm [thread:$0]  %s383, 256, %s385, %s365
        $region40: #{tpu_custom_call.1} parent=35 // pred_fallthru
          _
      $region36: #{tpu_custom_call.1} parent=5 // pred_fallthru
        _
      %p388 = scmp.le.s32.totalorder 2, %s13
      // Predicated region
      $region41: #{tpu_custom_call.1} parent=5 // pred_check
        %p389 = pneg %p388
      $region42: #{tpu_custom_call.1} parent=5 // pred_check_branch
        %391 = sbr.rel (%p389) target = $region44
      $region43: #{tpu_custom_call.1} parent=5 // pred_region
        %s392 = ssub.s32 %s13, 2
        // Predicated region
        $region45: #{tpu_custom_call.1} parent=43 // pred_check
          %p393 = pneg %p171
        $region46: #{tpu_custom_call.1} parent=43 // pred_check_branch
          %395 = sbr.rel (%p393) target = $region48
        $region47: #{tpu_custom_call.1} parent=43 // pred_region
          %s396 = sand.u32 %s156, 1
          %s397 = scalar_lea.sflag [#allocation3], %s396
          %s398 = sand.u32 %s156, 1
          %s399 = smul.addr %s398, 16
          %s400 = scalar_lea.vmem [#allocation2], %s399
          %402 = dma.done %s397, 256
        $region48: #{tpu_custom_call.1} parent=43 // pred_fallthru
          _
      $region44: #{tpu_custom_call.1} parent=5 // pred_fallthru
        _
    $region6: #{tpu_custom_call.1} parent=1 // loop_footer
      %s17 = sadd.s32 1, %s13
    $region7: #{tpu_custom_call.1} parent=1 // loop_footer_branch
      %12 = sbr.rel target = $region3
    $region8: #{tpu_custom_call.1} parent=1 // loop_exit
      _
    %403 = vsyncpa [#allocation3], 1
    %s404 = scalar_lea.sflag [#allocation3], 1
    %405 = vsyncpa %s404, 1

</llo_original>
